<compile_context>
chip_gen: v7x
topology: tpu7x:2x2x1
jax: 0.10.0
libtpu: 0.0.40
codegen_flags: <defaults>
</compile_context>

<pallas_src>
import jax
import jax.numpy as jnp
from jax.experimental import pallas as pl
from jax.experimental.pallas import tpu as pltpu
from typing import NamedTuple

LANE = 128     # vreg lane width
SUBLANE = 8    # f32 vreg sublane count


def _round_up(n, m):
    return ((n + m - 1) // m) * m


class FoodRecommenderParams(NamedTuple):
    w1: jax.Array   # [D_in, H_pad]  matmul dtype (bf16), zero-padded hidden lanes
    b1: jax.Array   # [1,   H_pad]   f32
    w2: jax.Array   # [H_pad, D_in]  matmul dtype (bf16), zero-padded hidden rows
    b2: jax.Array   # [1,   D_in]    f32
    hidden: int     # logical hidden size (for the cost estimate)


def _mlp_kernel(x_ref, w1_ref, b1_ref, w2_ref, b2_ref, o_ref):
    """One batch tile: ReLU(x @ W1 + b1) @ W2 + b2, all operands VMEM-resident."""
    # In-kernel cast to the matmul dtype (avoids a separate wrapper-side HBM pass).
    x = x_ref[...].astype(w1_ref.dtype)                                # [TB, D_in]
    h = jnp.dot(x, w1_ref[...], preferred_element_type=jnp.float32)    # [TB, H_pad] f32
    h = jnp.maximum(h + b1_ref[...], 0.0)                              # bias+ReLU in f32
    y = jnp.dot(h.astype(w2_ref.dtype), w2_ref[...],
                preferred_element_type=jnp.float32)                    # [TB, D_in] f32
    o_ref[...] = (y + b2_ref[...]).astype(o_ref.dtype)


def prepare_params(w1, b1, w2, b2, *, matmul_dtype=jnp.bfloat16):
    """One-time parameter prep (hoisted out of the per-call path).

    PyTorch layout in:  w1 [H, D_in], b1 [H], w2 [D_in, H], b2 [D_in].
    Kernel layout out:  w1 [D_in, H_pad] (bf16), b1 [1, H_pad] (f32),
                        w2 [H_pad, D_in] (bf16), b2 [1, D_in]  (f32).
    Zero-padding the hidden dim is exact: padded hidden units get 0 pre-activation
    (ReLU(0) = 0) and the corresponding W2 rows are 0, so real outputs are unchanged.
    """
    H, D_in = w1.shape
    H_pad = _round_up(H, LANE)
    w1_p = jnp.zeros((D_in, H_pad), matmul_dtype).at[:, :H].set(
        jnp.asarray(w1, matmul_dtype).T)
    b1_p = jnp.zeros((1, H_pad), jnp.float32).at[0, :H].set(
        jnp.asarray(b1, jnp.float32))
    w2_p = jnp.zeros((H_pad, D_in), matmul_dtype).at[:H, :].set(
        jnp.asarray(w2, matmul_dtype).T)
    b2_p = jnp.asarray(b2, jnp.float32).reshape(1, D_in)
    return FoodRecommenderParams(w1_p, b1_p, w2_p, b2_p, H)


def food_recommender_forward(x, params, *, tb=2048, min_grid_steps=4):
    """x: [B, D_in]; params from prepare_params(). Returns [B, D_in] float32."""
    w1_p, b1_p, w2_p, b2_p, H = params
    B, D_in = x.shape
    H_pad = w1_p.shape[1]
    assert w1_p.shape[0] == D_in and w2_p.shape[1] == D_in

    # Batch tile: big (amortizes the ~0.35us fixed cost per grid step) but capped so
    # that at large B the grid keeps >= min_grid_steps steps and the "parallel" axis
    # can shard across both v7x TensorCores. VMEM stays tiny (<~4 MiB) at TB=2048.
    TB = max(SUBLANE, min(tb, _round_up(pl.cdiv(B, min_grid_steps), SUBLANE)))
    grid = (pl.cdiv(B, TB),)

    # Real (unpadded) work / actual HBM bytes moved, for XLA's scheduler.
    flops = 2 * B * (D_in * H + H * D_in)
    bytes_accessed = (
        x.size * x.dtype.itemsize
        + sum(int(a.size) * a.dtype.itemsize for a in (w1_p, b1_p, w2_p, b2_p))
        + B * D_in * jnp.dtype(jnp.float32).itemsize)

    out = pl.pallas_call(
        _mlp_kernel,
        out_shape=jax.ShapeDtypeStruct((B, D_in), jnp.float32),
        grid_spec=pltpu.PrefetchScalarGridSpec(
            num_scalar_prefetch=0,
            grid=grid,
            in_specs=[
                pl.BlockSpec((TB, D_in), lambda i: (i, 0)),      # x tile per grid step
                pl.BlockSpec((D_in, H_pad), lambda i: (0, 0)),   # W1: VMEM-resident
                pl.BlockSpec((1, H_pad), lambda i: (0, 0)),      # b1: VMEM-resident
                pl.BlockSpec((H_pad, D_in), lambda i: (0, 0)),   # W2: VMEM-resident
                pl.BlockSpec((1, D_in), lambda i: (0, 0)),       # b2: VMEM-resident
            ],
            # Unpadded output block (full-dim last axis): edge-block OOB rows are
            # masked by Pallas, so garbage rows never land in valid output rows.
            out_specs=pl.BlockSpec((TB, D_in), lambda i: (i, 0)),
        ),
        compiler_params=pltpu.CompilerParams(
            dimension_semantics=("parallel",)),
        cost_estimate=pl.CostEstimate(
            flops=flops, transcendentals=0, bytes_accessed=bytes_accessed),
    )(x, w1_p, b1_p, w2_p, b2_p)
    return out


def _reference_forward(x, w1, b1, w2, b2):
    h = jnp.maximum(x @ w1.T + b1, 0.0)
    return h @ w2.T + b2


if __name__ == "__main__":
    # Database columns (per the module docstring): protein, carbohydrates, fat, nutriscore
    input_size = 4
    hidden_size = 11
    batch = 8

    key = jax.random.PRNGKey(0)
    kx, kw1, kb1, kw2, kb2, kx2 = jax.random.split(key, 6)

    x = jax.random.normal(kx, (batch, input_size), dtype=jnp.float32)

    # Deterministic init mimicking nn.Linear's uniform(-1/sqrt(fan_in), 1/sqrt(fan_in)).
    lim1 = 1.0 / jnp.sqrt(jnp.float32(input_size))
    lim2 = 1.0 / jnp.sqrt(jnp.float32(hidden_size))
    w1 = jax.random.uniform(kw1, (hidden_size, input_size), jnp.float32, -lim1, lim1)
    b1 = jax.random.uniform(kb1, (hidden_size,), jnp.float32, -lim1, lim1)
    w2 = jax.random.uniform(kw2, (input_size, hidden_size), jnp.float32, -lim2, lim2)
    b2 = jax.random.uniform(kb2, (input_size,), jnp.float32, -lim2, lim2)

    # One-time parameter preparation (transpose + pad + bf16 cast), out of the call path.
    params = jax.tree.map(jax.block_until_ready,
                          prepare_params(w1, b1, w2, b2))

    out = jax.block_until_ready(food_recommender_forward(x, params))
    ref = _reference_forward(x, w1, b1, w2, b2)
    assert out.shape == (batch, input_size)
    # bf16 matmul operands with f32 accumulation -> ~1e-3 relative error budget.
    assert jnp.allclose(out, ref, atol=3e-2, rtol=3e-2)

    # Second small check: batch not a multiple of the tile -> exercises the pl.cdiv
    # grid with a masked edge block (valid rows must be untouched by garbage rows).
    x_big = jax.random.normal(kx2, (100, input_size), dtype=jnp.float32)
    out_big = jax.block_until_ready(food_recommender_forward(x_big, params))
    ref_big = _reference_forward(x_big, w1, b1, w2, b2)
    assert out_big.shape == (100, input_size)
    assert jnp.allclose(out_big, ref_big, atol=3e-2, rtol=3e-2)

    print("KERNEL_OK")
</pallas_src>

<mosaic_0001>
module attributes {stable_mosaic.version = 11 : i64} {
  func.func @_mlp_kernel(%arg0: i32, %arg1: memref<8x4xf32, #tpu.memory_space<vmem>>, %arg2: memref<4x128xbf16, #tpu.memory_space<vmem>>, %arg3: memref<1x128xf32, #tpu.memory_space<vmem>>, %arg4: memref<128x4xbf16, #tpu.memory_space<vmem>>, %arg5: memref<1x4xf32, #tpu.memory_space<vmem>>, %arg6: memref<8x4xf32, #tpu.memory_space<vmem>>) attributes {dimension_semantics = [#tpu.dimension_semantics<parallel>], iteration_bounds = array<i64: 1>, scalar_prefetch = 0 : i64, scratch_operands = 0 : i64, tpu.core_type = #tpu.core_type<tc>, window_params = [{transform_indices = @transform_0, window_bounds = array<i64: 8, 4>}, {pipeline_mode = #tpu.pipeline_mode<synchronous>, transform_indices = @transform_1, window_bounds = array<i64: 4, 128>}, {pipeline_mode = #tpu.pipeline_mode<synchronous>, transform_indices = @transform_2, window_bounds = array<i64: 1, 128>}, {pipeline_mode = #tpu.pipeline_mode<synchronous>, transform_indices = @transform_3, window_bounds = array<i64: 128, 4>}, {pipeline_mode = #tpu.pipeline_mode<synchronous>, transform_indices = @transform_4, window_bounds = array<i64: 1, 4>}, {transform_indices = @transform_5, window_bounds = array<i64: 8, 4>}]} {
    %c0 = arith.constant 0 : index
    %c0_0 = arith.constant 0 : index
    %0 = vector.load %arg1[%c0, %c0_0] : memref<8x4xf32, #tpu.memory_space<vmem>>, vector<8x4xf32>
    %1 = arith.truncf %0 : vector<8x4xf32> to vector<8x4xbf16>
    %c0_1 = arith.constant 0 : index
    %c0_2 = arith.constant 0 : index
    %2 = vector.load %arg2[%c0_1, %c0_2] : memref<4x128xbf16, #tpu.memory_space<vmem>>, vector<4x128xbf16>
    %cst = arith.constant dense<0.000000e+00> : vector<8x128xf32>
    %3 = tpu.matmul %1, %2, %cst {dimension_numbers = #tpu.dot_dimension_numbers<[1], [0], [0], [1], [0, 0, 1, 1], [], []>} : vector<8x4xbf16>, vector<4x128xbf16>, vector<8x128xf32> -> vector<8x128xf32>
    %c0_3 = arith.constant 0 : index
    %c0_4 = arith.constant 0 : index
    %4 = vector.load %arg3[%c0_3, %c0_4] : memref<1x128xf32, #tpu.memory_space<vmem>>, vector<1x128xf32>
    %5 = vector.broadcast %4 : vector<1x128xf32> to vector<8x128xf32>
    %6 = arith.addf %3, %5 : vector<8x128xf32>
    %cst_5 = arith.constant 0.000000e+00 : f32
    %7 = vector.broadcast %cst_5 : f32 to vector<8x128xf32>
    %8 = arith.maximumf %6, %7 : vector<8x128xf32>
    %9 = arith.truncf %8 : vector<8x128xf32> to vector<8x128xbf16>
    %c0_6 = arith.constant 0 : index
    %c0_7 = arith.constant 0 : index
    %10 = vector.load %arg4[%c0_6, %c0_7] : memref<128x4xbf16, #tpu.memory_space<vmem>>, vector<128x4xbf16>
    %cst_8 = arith.constant dense<0.000000e+00> : vector<8x4xf32>
    %11 = tpu.matmul %9, %10, %cst_8 {dimension_numbers = #tpu.dot_dimension_numbers<[1], [0], [0], [1], [0, 0, 1, 1], [], []>} : vector<8x128xbf16>, vector<128x4xbf16>, vector<8x4xf32> -> vector<8x4xf32>
    %c0_9 = arith.constant 0 : index
    %c0_10 = arith.constant 0 : index
    %12 = vector.load %arg5[%c0_9, %c0_10] : memref<1x4xf32, #tpu.memory_space<vmem>>, vector<1x4xf32>
    %13 = vector.broadcast %12 : vector<1x4xf32> to vector<8x4xf32>
    %14 = arith.addf %11, %13 : vector<8x4xf32>
    %c0_11 = arith.constant 0 : index
    %c0_12 = arith.constant 0 : index
    %15 = vector.load %arg6[%c0_11, %c0_12] : memref<8x4xf32, #tpu.memory_space<vmem>>, vector<8x4xf32>
    tpu.vector_store %arg6[%c0_11, %c0_12], %14 {strides = array<i32>} : memref<8x4xf32, #tpu.memory_space<vmem>>, vector<8x4xf32>,
    return
  }
  func.func @transform_0(%arg0: i32) -> (i32, i32) {
    %c0_i32 = arith.constant 0 : i32
    %c0_i32_0 = arith.constant 0 : i32
    return %arg0, %c0_i32 : i32, i32
  }
  func.func @transform_1(%arg0: i32) -> (i32, i32) {
    %c0_i32 = arith.constant 0 : i32
    %c0_i32_0 = arith.constant 0 : i32
    %c0_i32_1 = arith.constant 0 : i32
    return %c0_i32, %c0_i32_0 : i32, i32
  }
  func.func @transform_2(%arg0: i32) -> (i32, i32) {
    %c0_i32 = arith.constant 0 : i32
    %c0_i32_0 = arith.constant 0 : i32
    %c0_i32_1 = arith.constant 0 : i32
    return %c0_i32, %c0_i32_0 : i32, i32
  }
  func.func @transform_3(%arg0: i32) -> (i32, i32) {
    %c0_i32 = arith.constant 0 : i32
    %c0_i32_0 = arith.constant 0 : i32
    %c0_i32_1 = arith.constant 0 : i32
    return %c0_i32, %c0_i32_0 : i32, i32
  }
  func.func @transform_4(%arg0: i32) -> (i32, i32) {
    %c0_i32 = arith.constant 0 : i32
    %c0_i32_0 = arith.constant 0 : i32
    %c0_i32_1 = arith.constant 0 : i32
    return %c0_i32, %c0_i32_0 : i32, i32
  }
  func.func @transform_5(%arg0: i32) -> (i32, i32) {
    %c0_i32 = arith.constant 0 : i32
    %c0_i32_0 = arith.constant 0 : i32
    return %arg0, %c0_i32 : i32, i32
  }
}

</mosaic_0001>

<llo_original>
// kernel: tpu_custom_call.1
$region0: #{tpu_custom_call.1}
  #allocation0 [shape = 'u32[]', space=smem, size = 0x4, offset = 0x4, fixed_abs, tag = 'smem constant byte address 0x4 - core index']
  #allocation1 [shape = 'u32[144,128]{1,0:T(1,128)}', space=vmem, size = 0x12000, scoped, tag = 'internal scratch']
  %s0 = inlined_call_operand.vmem [shape: f32[8,4], index: 0, kind: input, shape index: {}]
  %s1 = inlined_call_operand.vmem [shape: bf16[4,128], index: 1, kind: input, shape index: {}]
  %s2 = inlined_call_operand.vmem [shape: f32[1,128], index: 2, kind: input, shape index: {}]
  %s3 = inlined_call_operand.vmem [shape: bf16[128,4], index: 3, kind: input, shape index: {}]
  %s4 = inlined_call_operand.vmem [shape: f32[1,4], index: 4, kind: input, shape index: {}]
  %s5 = inlined_call_operand.vmem [shape: f32[8,4], index: 5, kind: output, shape index: {}]
  %s6 = sld [smem:[#allocation0]]
  $region30: #{tpu_custom_call.1} parent=0
    _
  %s8 = ssub.s32 1, %s6
  %s9 = scalar_select 0, %s8, %s6
  // Predicated region
  $region2: #{tpu_custom_call.1} parent=0 // pred_check
    _
  $region3: #{tpu_custom_call.1} parent=0 // pred_check_branch
    %11 = sbr.rel (0) target = $region5
  $region4: #{tpu_custom_call.1} parent=0 // pred_region
    _
  $region5: #{tpu_custom_call.1} parent=0 // pred_fallthru
    _
  // Predicated region
  $region6: #{tpu_custom_call.1} parent=0 // pred_check
    _
  $region7: #{tpu_custom_call.1} parent=0 // pred_check_branch
    %13 = sbr.rel (0) target = $region9
  $region8: #{tpu_custom_call.1} parent=0 // pred_region
    _
  $region9: #{tpu_custom_call.1} parent=0 // pred_fallthru
    _
  // Predicated region
  $region10: #{tpu_custom_call.1} parent=0 // pred_check
    _
  $region11: #{tpu_custom_call.1} parent=0 // pred_check_branch
    %15 = sbr.rel (0) target = $region13
  $region12: #{tpu_custom_call.1} parent=0 // pred_region
    _
  $region13: #{tpu_custom_call.1} parent=0 // pred_fallthru
    _
  // Predicated region
  $region14: #{tpu_custom_call.1} parent=0 // pred_check
    _
  $region15: #{tpu_custom_call.1} parent=0 // pred_check_branch
    %17 = sbr.rel (0) target = $region17
  $region16: #{tpu_custom_call.1} parent=0 // pred_region
    _
  $region17: #{tpu_custom_call.1} parent=0 // pred_fallthru
    _
  // Predicated region
  $region18: #{tpu_custom_call.1} parent=0 // pred_check
    _
  $region19: #{tpu_custom_call.1} parent=0 // pred_check_branch
    %19 = sbr.rel (0) target = $region21
  $region20: #{tpu_custom_call.1} parent=0 // pred_region
    _
  $region21: #{tpu_custom_call.1} parent=0 // pred_fallthru
    _
  %v21 = vld [vmem:[%s0] sm:$0xff]
  %v22 = vpack.c.bf16 %v21, %v21
  %v23 = vld [vmem:[%s1] sm:$0x3]
  %v24 = vld [vmem:[%s2] sm:$0x1]
  %v26 = vlaneseq
  %v27 = vshrl.u32 %v26, 7
  %v28 = vsub.s32 0, %v27
  %v29 = vrot.slane %v24, %v28
  %vm31 = vcmask 31744
  %v33 = vsel %vm31, %v22, 0
  %vm35 = vcmask 1041408
  %v37 = vsel %vm35, %v23, 0
  %39 = vmatprep.subr.bf16.mxu0 0
  %40 = vmatpush1.bf16.msra.mxu0 %v37
  %41 = vmatprep.subr.bf16.mxu0 0
  %42 = vmatpush1.bf16.msra.mxu0 0
  %43 = vmatprep.subr.bf16.mxu0 0
  %44 = vmatpush1.bf16.msra.mxu0 0
  %45 = vmatprep.subr.bf16.mxu0 0
  %46 = vmatpush1.bf16.msra.mxu0 0
  %47 = vmatprep.subr.bf16.mxu0 0
  %48 = vmatpush1.bf16.msra.mxu0 0
  %49 = vmatprep.subr.bf16.mxu0 0
  %50 = vmatpush1.bf16.msra.mxu0 0
  %51 = vmatprep.subr.bf16.mxu0 0
  %52 = vmatpush1.bf16.msra.mxu0 0
  %53 = vmatprep.subr.bf16.mxu0 0
  %54 = vmatpush1.bf16.msra.mxu0 0
  %55 = vmatprep.subr.bf16.mxu0 0
  %56 = vmatpush1.bf16.msra.mxu0 0
  %57 = vmatprep.subr.bf16.mxu0 0
  %58 = vmatpush1.bf16.msra.mxu0 0
  %59 = vmatprep.subr.bf16.mxu0 0
  %60 = vmatpush1.bf16.msra.mxu0 0
  %61 = vmatprep.subr.bf16.mxu0 0
  %62 = vmatpush1.bf16.msra.mxu0 0
  %63 = vmatprep.subr.bf16.mxu0 0
  %64 = vmatpush1.bf16.msra.mxu0 0
  %65 = vmatprep.subr.bf16.mxu0 0
  %66 = vmatpush1.bf16.msra.mxu0 0
  %67 = vmatprep.subr.bf16.mxu0 0
  %68 = vmatpush1.bf16.msra.mxu0 0
  %69 = vmatprep.subr.bf16.mxu0 0
  %70 = vmatpush1.bf16.msra.mxu0 0
  %71 = vmatprep.mubr.bf16.mxu0 0
  %72 = vmatmul.mubr.bf16.gmra.mrb[0].mxu0 %v33
  %v73 = vpop.f32.mrb[0].mxu0
  %v74 = vadd.f32 %v29, %v73
  %v75 = vpop.f32.mrb[0].mxu0
  %v76 = vpop.f32.mrb[0].mxu0
  %v77 = vpop.f32.mrb[0].mxu0
  %78 = vdwg.mxu0
  %v79 = vmax.f32 %v74, 0.0
  %v80 = vpack.c.bf16 %v79, %v79
  %v81 = vld [vmem:[%s3] sm:$0xf]
  %v82 = vld [vmem:[%s3 + $0x4] sm:$0xf]
  %v83 = vld [vmem:[%s3 + $0x8] sm:$0xf]
  %v84 = vld [vmem:[%s3 + $0xc] sm:$0xf]
  %v85 = vld [vmem:[%s3 + $0x10] sm:$0xf]
  %v86 = vld [vmem:[%s3 + $0x14] sm:$0xf]
  %v87 = vld [vmem:[%s3 + $0x18] sm:$0xf]
  %v88 = vld [vmem:[%s3 + $0x1c] sm:$0xf]
  %v89 = vld [vmem:[%s3 + $0x20] sm:$0xf]
  %v90 = vld [vmem:[%s3 + $0x24] sm:$0xf]
  %v91 = vld [vmem:[%s3 + $0x28] sm:$0xf]
  %v92 = vld [vmem:[%s3 + $0x2c] sm:$0xf]
  %v93 = vld [vmem:[%s3 + $0x30] sm:$0xf]
  %v94 = vld [vmem:[%s3 + $0x34] sm:$0xf]
  %v95 = vld [vmem:[%s3 + $0x38] sm:$0xf]
  %v96 = vld [vmem:[%s3 + $0x3c] sm:$0xf]
  %v97 = vld [vmem:[%s4] sm:$0x1]
  %v99 = vlaneseq
  %v100 = vshrl.u32 %v99, 7
  %v101 = vsub.s32 0, %v100
  %v102 = vrot.slane %v97, %v101
  %v120 = vunpack.c.l.b16 %v81
  %v121 = vunpack.c.l.b16 %v82
  %v122 = vunpack.c.l.b16 %v83
  %v123 = vunpack.c.l.b16 %v84
  %v124 = vunpack.c.l.b16 %v85
  %v125 = vunpack.c.l.b16 %v86
  %v126 = vunpack.c.l.b16 %v87
  %v127 = vunpack.c.l.b16 %v88
  %v128 = vunpack.c.l.b16 %v89
  %v129 = vunpack.c.l.b16 %v90
  %v130 = vunpack.c.l.b16 %v91
  %v131 = vunpack.c.l.b16 %v92
  %v132 = vunpack.c.l.b16 %v93
  %v133 = vunpack.c.l.b16 %v94
  %v134 = vunpack.c.l.b16 %v95
  %v135 = vunpack.c.l.b16 %v96
  %v136 = vpack.c.b16 %v121, %v120
  %v137 = vpack.c.b16 %v123, %v122
  %v138 = vpack.c.b16 %v125, %v124
  %v139 = vpack.c.b16 %v127, %v126
  %v140 = vpack.c.b16 %v129, %v128
  %v141 = vpack.c.b16 %v131, %v130
  %v142 = vpack.c.b16 %v133, %v132
  %v143 = vpack.c.b16 %v135, %v134
  %152 = vmatprep.subr.bf16.mxu0 0
  %153 = vmatpush1.bf16.msra.mxu0 %v136
  %154 = vmatprep.subr.bf16.mxu0 0
  %155 = vmatpush1.bf16.msra.mxu0 %v137
  %156 = vmatprep.subr.bf16.mxu0 0
  %157 = vmatpush1.bf16.msra.mxu0 %v138
  %158 = vmatprep.subr.bf16.mxu0 0
  %159 = vmatpush1.bf16.msra.mxu0 %v139
  %160 = vmatprep.subr.bf16.mxu0 0
  %161 = vmatpush1.bf16.msra.mxu0 %v140
  %162 = vmatprep.subr.bf16.mxu0 0
  %163 = vmatpush1.bf16.msra.mxu0 %v141
  %164 = vmatprep.subr.bf16.mxu0 0
  %165 = vmatpush1.bf16.msra.mxu0 %v142
  %166 = vmatprep.subr.bf16.mxu0 0
  %167 = vmatpush1.bf16.msra.mxu0 %v143
  %168 = vmatprep.subr.bf16.mxu0 0
  %169 = vmatpush1.bf16.msra.mxu0 0
  %170 = vmatprep.subr.bf16.mxu0 0
  %171 = vmatpush1.bf16.msra.mxu0 0
  %172 = vmatprep.subr.bf16.mxu0 0
  %173 = vmatpush1.bf16.msra.mxu0 0
  %174 = vmatprep.subr.bf16.mxu0 0
  %175 = vmatpush1.bf16.msra.mxu0 0
  %176 = vmatprep.subr.bf16.mxu0 0
  %177 = vmatpush1.bf16.msra.mxu0 0
  %178 = vmatprep.subr.bf16.mxu0 0
  %179 = vmatpush1.bf16.msra.mxu0 0
  %180 = vmatprep.subr.bf16.mxu0 0
  %181 = vmatpush1.bf16.msra.mxu0 0
  %182 = vmatprep.subr.bf16.mxu0 0
  %183 = vmatpush1.bf16.msra.mxu0 0
  %184 = vmatprep.mubr.bf16.mxu0 0
  %185 = vmatmul.mubr.bf16.gmra.mrb[0].mxu0 %v80
  %v186 = vpop.f32.mrb[0].mxu0
  %v187 = vadd.f32 %v102, %v186
  %v188 = vpop.f32.mrb[0].mxu0
  %v189 = vpop.f32.mrb[0].mxu0
  %v190 = vpop.f32.mrb[0].mxu0
  %191 = vdwg.mxu0
  %192 = vst.msk [vmem:[%s5] sm:$0xff] %vm31, %v187
  // Predicated region
  $region22: #{tpu_custom_call.1} parent=0 // pred_check
    _
  $region23: #{tpu_custom_call.1} parent=0 // pred_check_branch
    %194 = sbr.rel (0) target = $region25
  $region24: #{tpu_custom_call.1} parent=0 // pred_region
    _
  $region25: #{tpu_custom_call.1} parent=0 // pred_fallthru
    _
  // Predicated region
  $region26: #{tpu_custom_call.1} parent=0 // pred_check
    _
  $region27: #{tpu_custom_call.1} parent=0 // pred_check_branch
    %196 = sbr.rel (0) target = $region29
  $region28: #{tpu_custom_call.1} parent=0 // pred_region
    _
  $region29: #{tpu_custom_call.1} parent=0 // pred_fallthru
    _

</llo_original>
